<compile_context>
chip_gen: v7x
topology: tpu7x:2x2x1
jax: 0.10.0
libtpu: 0.0.40
codegen_flags: <defaults>
</compile_context>

<pallas_src>
import jax
import jax.numpy as jnp
from jax import lax
from jax.experimental import pallas as pl
from jax.experimental.pallas import tpu as pltpu


def _round_up(x, m):
    return ((x + m - 1) // m) * m


# ---------------------------------------------------------------------------
# Kernels
# ---------------------------------------------------------------------------
def _backbone_kernel(p_ref, w1_ref, b1_ref, w2_ref, b2_ref, pool_ref, feat_ref):
    """Stub backbone block: rows @ w1 -> ReLU -> pooling matmul -> @ w2 + b2.

    p_ref   : (NB*P, Dp_pad)   flattened patch rows for NB images
    w1_ref  : (Dp_pad, C1)     patch-embed weight
    b1_ref  : (1, C1)
    w2_ref  : (C1, F_pad)      final FC weight
    b2_ref  : (1, F_pad)
    pool_ref: (NB, NB*P)       block-diagonal 1/P averaging matrix
    feat_ref: (NB, F_pad)      per-image features
    """
    h = jnp.dot(p_ref[...], w1_ref[...], preferred_element_type=jnp.float32)
    h = jnp.maximum(h + b1_ref[...], 0.0)                          # (NB*P, C1)
    pooled = jnp.dot(pool_ref[...], h,
                     preferred_element_type=jnp.float32)           # (NB, C1)
    feat = jnp.dot(pooled, w2_ref[...],
                   preferred_element_type=jnp.float32) + b2_ref[...]
    feat_ref[...] = feat.astype(feat_ref.dtype)                    # (NB, F_pad)


def _head_kernel(blk_ref, loc_ref, f_ref, w_ref, b_ref, out_ref, acc_ref):
    """sample() + Linear(3F, 11) + Softmax(dim=1); one gathered row per step.

    Grid step j DMAs only the 8-row feature block containing sampled row j
    (block index comes from scalar prefetch), selects the row with a sublane
    mask, and accumulates its partial matmul against the j-th (F_pad, K_pad)
    slab of the head weight.  Softmax is applied on the last step; padded
    class columns carry a -1e30 bias so they contribute exp(...) == 0.
    """
    j = pl.program_id(0)

    @pl.when(j == 0)
    def _():
        acc_ref[...] = jnp.zeros_like(acc_ref)

    nb = f_ref.shape[0]
    row_ids = lax.broadcasted_iota(jnp.int32, (nb, 1), 0)
    mask = (row_ids == loc_ref[j]).astype(jnp.float32)             # (NB, 1)
    row = jnp.sum(f_ref[...] * mask, axis=0, keepdims=True)        # (1, F_pad)
    acc_ref[...] += jnp.dot(row, w_ref[...],
                            preferred_element_type=jnp.float32)    # (1, K_pad)

    @pl.when(j == pl.num_programs(0) - 1)
    def _():
        logits = acc_ref[...] + b_ref[...]
        m = jnp.max(logits, axis=1, keepdims=True)
        e = jnp.exp(logits - m)
        out_ref[...] = (e / jnp.sum(e, axis=1, keepdims=True)).astype(out_ref.dtype)


# ---------------------------------------------------------------------------
# pallas_call wrappers
# ---------------------------------------------------------------------------
def backbone_forward(rows2d, w1, b1, w2, b2, pool, *,
                     images_per_block, patches_per_image):
    nr, dp = rows2d.shape
    c1 = w1.shape[1]
    fp = w2.shape[1]
    rows_per_block = images_per_block * patches_per_image
    n_images = nr // patches_per_image
    n_blocks = n_images // images_per_block

    cost = pl.CostEstimate(
        flops=2 * nr * dp * c1
              + 2 * n_images * rows_per_block * c1
              + 2 * n_images * c1 * fp,
        transcendentals=0,
        bytes_accessed=4 * (nr * dp + dp * c1 + c1 * fp + n_images * fp
                            + images_per_block * rows_per_block),
    )
    return pl.pallas_call(
        _backbone_kernel,
        out_shape=jax.ShapeDtypeStruct((n_images, fp), jnp.float32),
        grid_spec=pltpu.PrefetchScalarGridSpec(
            num_scalar_prefetch=0,
            grid=(n_blocks,),
            in_specs=[
                pl.BlockSpec((rows_per_block, dp), lambda i: (i, 0)),
                pl.BlockSpec((dp, c1), lambda i: (0, 0)),
                pl.BlockSpec((1, c1), lambda i: (0, 0)),
                pl.BlockSpec((c1, fp), lambda i: (0, 0)),
                pl.BlockSpec((1, fp), lambda i: (0, 0)),
                pl.BlockSpec((images_per_block, rows_per_block), lambda i: (0, 0)),
            ],
            out_specs=pl.BlockSpec((images_per_block, fp), lambda i: (i, 0)),
        ),
        compiler_params=pltpu.CompilerParams(
            dimension_semantics=("parallel",),
            vmem_limit_bytes=32 * 1024 * 1024,
        ),
        cost_estimate=cost,
    )(rows2d, w1, b1, w2, b2, pool)


def head_forward(blk_idx, loc_idx, feat, w3, b_fc, *, gather_block):
    _, fp = feat.shape
    kp = w3.shape[2]
    cost = pl.CostEstimate(
        flops=2 * 3 * fp * kp + 4 * kp,
        transcendentals=kp,
        bytes_accessed=4 * (3 * gather_block * fp + 3 * fp * kp + 2 * kp),
    )
    return pl.pallas_call(
        _head_kernel,
        out_shape=jax.ShapeDtypeStruct((1, kp), jnp.float32),
        grid_spec=pltpu.PrefetchScalarGridSpec(
            num_scalar_prefetch=2,
            grid=(3,),
            in_specs=[
                pl.BlockSpec((gather_block, fp), lambda j, blk, loc: (blk[j], 0)),
                pl.BlockSpec((None, fp, kp), lambda j, blk, loc: (j, 0, 0)),
                pl.BlockSpec((1, kp), lambda j, blk, loc: (0, 0)),
            ],
            out_specs=pl.BlockSpec((1, kp), lambda j, blk, loc: (0, 0)),
            scratch_shapes=[pltpu.VMEM((1, kp), jnp.float32)],
        ),
        compiler_params=pltpu.CompilerParams(
            dimension_semantics=("arbitrary",),
            vmem_limit_bytes=16 * 1024 * 1024,
        ),
        cost_estimate=cost,
    )(blk_idx, loc_idx, feat, w3, b_fc)


# ---------------------------------------------------------------------------
# Module glue (parameter init + NCHW -> lane-dense patch-row layout)
# ---------------------------------------------------------------------------
def _patchify(x_nchw, ps):
    """(N, C, H, W) -> (N, P, C*ps*ps) with P = (H/ps)*(W/ps)."""
    n, c, h, w = x_nchw.shape
    x = x_nchw.reshape(n, c, h // ps, ps, w // ps, ps)
    x = x.transpose(0, 2, 4, 1, 3, 5)            # (N, H/ps, W/ps, C, ps, ps)
    return x.reshape(n, (h // ps) * (w // ps), c * ps * ps)


class Extractor:
    NUM_CLASSES = 11
    IMAGES_PER_BLOCK = 8       # backbone grid tile == head gather block (8-sublane aligned)

    def __init__(self, sample_channels=3000, *, patch_size=4, stem_width=128,
                 in_channels=3, key=jax.random.PRNGKey(1)):
        assert sample_channels % 3 == 0
        self.patch_size = patch_size
        self.feature_dim = sample_channels // 3          # 1000 == resnet50 output width

        dp = in_channels * patch_size * patch_size       # 48
        self.dp = dp
        self.dp_pad = _round_up(dp, 128)                 # 128
        self.c1 = _round_up(stem_width, 128)             # 128
        self.f_pad = _round_up(self.feature_dim, 128)    # 1024
        self.k_pad = _round_up(self.NUM_CLASSES, 128)    # 128

        k1, k2, k3 = jax.random.split(key, 3)

        # --- stub backbone params (deterministic, stands in for resnet50) ---
        w1 = jax.random.normal(k1, (dp, self.c1), jnp.float32) * 0.05
        self.w1 = jnp.pad(w1, ((0, self.dp_pad - dp), (0, 0)))
        self.b1 = jnp.zeros((1, self.c1), jnp.float32)
        w2 = jax.random.normal(k2, (self.c1, self.feature_dim), jnp.float32) * 0.05
        self.w2 = jnp.pad(w2, ((0, 0), (0, self.f_pad - self.feature_dim)))
        self.b2 = jnp.zeros((1, self.f_pad), jnp.float32)

        # --- fc head: Linear(sample_channels, 11) with weights_init_uniform -
        # torch: weight ~ U(0, 0.5), bias = 0.  Stored as (3, F, K): each
        # sampled feature row multiplies its own (F, K) slab, which is exactly
        # concat([f0, fm, fl]) @ W.  Zero-padded to lane-dense (3, F_pad, K_pad);
        # padded class columns get a -1e30 bias so softmax ignores them.
        w_fc = jax.random.uniform(k3, (3, self.feature_dim, self.NUM_CLASSES),
                                  jnp.float32, 0.0, 0.5)
        self.w_fc = jnp.pad(w_fc, ((0, 0),
                                   (0, self.f_pad - self.feature_dim),
                                   (0, self.k_pad - self.NUM_CLASSES)))
        b_fc = jnp.full((1, self.k_pad), -1e30, jnp.float32)
        self.b_fc = b_fc.at[:, :self.NUM_CLASSES].set(0.0)

    def __call__(self, x):
        # x: (1, N, C, H, W) — squeeze leading dim like the PyTorch forward.
        x = jnp.squeeze(x, axis=0)                       # (N, C, H, W)
        n = x.shape[0]
        nb = self.IMAGES_PER_BLOCK

        patches = _patchify(x, self.patch_size)          # (N, P, Dp)
        p = patches.shape[1]
        rows2d = patches.reshape(n * p, self.dp)         # (N*P, Dp)

        # Lane-dense / sublane-aligned zero padding done once in the wrapper.
        n_images = _round_up(n, nb)
        rows2d = jnp.pad(rows2d, ((0, (n_images - n) * p),
                                  (0, self.dp_pad - self.dp)))

        # Per-image global average pool as a block-diagonal matmul.
        img_of_row = jnp.repeat(jnp.arange(nb, dtype=jnp.int32), p)
        pool = (jnp.arange(nb, dtype=jnp.int32)[:, None] == img_of_row[None, :])
        pool = pool.astype(jnp.float32) / p              # (NB, NB*P)

        feat = backbone_forward(rows2d, self.w1, self.b1, self.w2, self.b2, pool,
                                images_per_block=nb,
                                patches_per_image=p)     # (N_pad, F_pad)

        # sample(): rows 0, N//2, N-1, gathered inside the head kernel via
        # scalar-prefetch block indices (only three 8-row blocks are DMA'd).
        rows = (0, n // 2, n - 1)
        blk_idx = jnp.array([r // nb for r in rows], jnp.int32)
        loc_idx = jnp.array([r % nb for r in rows], jnp.int32)

        out_pad = head_forward(blk_idx, loc_idx, feat, self.w_fc, self.b_fc,
                               gather_block=nb)          # (1, K_pad)
        return out_pad[:, :self.NUM_CLASSES]             # (1, 11)


# ---------------------------------------------------------------------------
# Demo
# ---------------------------------------------------------------------------
if __name__ == "__main__":
    key = jax.random.PRNGKey(0)
    # Small shapes consistent with the module's forward: (1, N, 3, H, W).
    # N=16 so the backbone grid has 2 steps (real pipelining / megacore path).
    x = jax.random.normal(key, (1, 16, 3, 16, 16), jnp.float32)

    model = Extractor(sample_channels=3000)
    out = model(x)
    out = jax.block_until_ready(out)

    assert out.shape == (1, 11), out.shape
    assert bool(jnp.all(jnp.isfinite(out)))
    # Softmax row must sum to 1.
    assert abs(float(jnp.sum(out)) - 1.0) < 1e-4, float(jnp.sum(out))

    print("KERNEL_OK")
</pallas_src>

<mosaic_0001>
module attributes {stable_mosaic.version = 11 : i64} {
  func.func @_backbone_kernel(%arg0: i32, %arg1: memref<128x128xf32, #tpu.memory_space<vmem>>, %arg2: memref<128x128xf32, #tpu.memory_space<vmem>>, %arg3: memref<1x128xf32, #tpu.memory_space<vmem>>, %arg4: memref<128x1024xf32, #tpu.memory_space<vmem>>, %arg5: memref<1x1024xf32, #tpu.memory_space<vmem>>, %arg6: memref<8x128xf32, #tpu.memory_space<vmem>>, %arg7: memref<8x1024xf32, #tpu.memory_space<vmem>>) attributes {dimension_semantics = [#tpu.dimension_semantics<parallel>], iteration_bounds = array<i64: 2>, scalar_prefetch = 0 : i64, scratch_operands = 0 : i64, tpu.core_type = #tpu.core_type<tc>, window_params = [{transform_indices = @transform_0, window_bounds = array<i64: 128, 128>}, {pipeline_mode = #tpu.pipeline_mode<synchronous>, transform_indices = @transform_1, window_bounds = array<i64: 128, 128>}, {pipeline_mode = #tpu.pipeline_mode<synchronous>, transform_indices = @transform_2, window_bounds = array<i64: 1, 128>}, {pipeline_mode = #tpu.pipeline_mode<synchronous>, transform_indices = @transform_3, window_bounds = array<i64: 128, 1024>}, {pipeline_mode = #tpu.pipeline_mode<synchronous>, transform_indices = @transform_4, window_bounds = array<i64: 1, 1024>}, {pipeline_mode = #tpu.pipeline_mode<synchronous>, transform_indices = @transform_5, window_bounds = array<i64: 8, 128>}, {transform_indices = @transform_6, window_bounds = array<i64: 8, 1024>}]} {
    %c0 = arith.constant 0 : index
    %c0_0 = arith.constant 0 : index
    %0 = vector.load %arg1[%c0, %c0_0] : memref<128x128xf32, #tpu.memory_space<vmem>>, vector<128x128xf32>
    %c0_1 = arith.constant 0 : index
    %c0_2 = arith.constant 0 : index
    %1 = vector.load %arg2[%c0_1, %c0_2] : memref<128x128xf32, #tpu.memory_space<vmem>>, vector<128x128xf32>
    %cst = arith.constant dense<0.000000e+00> : vector<128x128xf32>
    %2 = tpu.matmul %0, %1, %cst {dimension_numbers = #tpu.dot_dimension_numbers<[1], [0], [0], [1], [0, 0, 1, 1], [], []>} : vector<128x128xf32>, vector<128x128xf32>, vector<128x128xf32> -> vector<128x128xf32>
    %c0_3 = arith.constant 0 : index
    %c0_4 = arith.constant 0 : index
    %3 = vector.load %arg3[%c0_3, %c0_4] : memref<1x128xf32, #tpu.memory_space<vmem>>, vector<1x128xf32>
    %4 = vector.broadcast %3 : vector<1x128xf32> to vector<128x128xf32>
    %5 = arith.addf %2, %4 : vector<128x128xf32>
    %cst_5 = arith.constant 0.000000e+00 : f32
    %6 = vector.broadcast %cst_5 : f32 to vector<128x128xf32>
    %7 = arith.maximumf %5, %6 : vector<128x128xf32>
    %c0_6 = arith.constant 0 : index
    %c0_7 = arith.constant 0 : index
    %8 = vector.load %arg6[%c0_6, %c0_7] : memref<8x128xf32, #tpu.memory_space<vmem>>, vector<8x128xf32>
    %cst_8 = arith.constant dense<0.000000e+00> : vector<8x128xf32>
    %9 = tpu.matmul %8, %7, %cst_8 {dimension_numbers = #tpu.dot_dimension_numbers<[1], [0], [0], [1], [0, 0, 1, 1], [], []>} : vector<8x128xf32>, vector<128x128xf32>, vector<8x128xf32> -> vector<8x128xf32>
    %c0_9 = arith.constant 0 : index
    %c0_10 = arith.constant 0 : index
    %10 = vector.load %arg4[%c0_9, %c0_10] : memref<128x1024xf32, #tpu.memory_space<vmem>>, vector<128x1024xf32>
    %cst_11 = arith.constant dense<0.000000e+00> : vector<8x1024xf32>
    %11 = tpu.matmul %9, %10, %cst_11 {dimension_numbers = #tpu.dot_dimension_numbers<[1], [0], [0], [1], [0, 0, 1, 1], [], []>} : vector<8x128xf32>, vector<128x1024xf32>, vector<8x1024xf32> -> vector<8x1024xf32>
    %c0_12 = arith.constant 0 : index
    %c0_13 = arith.constant 0 : index
    %12 = vector.load %arg5[%c0_12, %c0_13] : memref<1x1024xf32, #tpu.memory_space<vmem>>, vector<1x1024xf32>
    %13 = vector.broadcast %12 : vector<1x1024xf32> to vector<8x1024xf32>
    %14 = arith.addf %11, %13 : vector<8x1024xf32>
    %c0_14 = arith.constant 0 : index
    %c0_15 = arith.constant 0 : index
    %15 = vector.load %arg7[%c0_14, %c0_15] : memref<8x1024xf32, #tpu.memory_space<vmem>>, vector<8x1024xf32>
    tpu.vector_store %arg7[%c0_14, %c0_15], %14 {strides = array<i32>} : memref<8x1024xf32, #tpu.memory_space<vmem>>, vector<8x1024xf32>,
    return
  }
  func.func @transform_0(%arg0: i32) -> (i32, i32) {
    %c0_i32 = arith.constant 0 : i32
    %c0_i32_0 = arith.constant 0 : i32
    return %arg0, %c0_i32 : i32, i32
  }
  func.func @transform_1(%arg0: i32) -> (i32, i32) {
    %c0_i32 = arith.constant 0 : i32
    %c0_i32_0 = arith.constant 0 : i32
    %c0_i32_1 = arith.constant 0 : i32
    return %c0_i32, %c0_i32_0 : i32, i32
  }
  func.func @transform_2(%arg0: i32) -> (i32, i32) {
    %c0_i32 = arith.constant 0 : i32
    %c0_i32_0 = arith.constant 0 : i32
    %c0_i32_1 = arith.constant 0 : i32
    return %c0_i32, %c0_i32_0 : i32, i32
  }
  func.func @transform_3(%arg0: i32) -> (i32, i32) {
    %c0_i32 = arith.constant 0 : i32
    %c0_i32_0 = arith.constant 0 : i32
    %c0_i32_1 = arith.constant 0 : i32
    return %c0_i32, %c0_i32_0 : i32, i32
  }
  func.func @transform_4(%arg0: i32) -> (i32, i32) {
    %c0_i32 = arith.constant 0 : i32
    %c0_i32_0 = arith.constant 0 : i32
    %c0_i32_1 = arith.constant 0 : i32
    return %c0_i32, %c0_i32_0 : i32, i32
  }
  func.func @transform_5(%arg0: i32) -> (i32, i32) {
    %c0_i32 = arith.constant 0 : i32
    %c0_i32_0 = arith.constant 0 : i32
    %c0_i32_1 = arith.constant 0 : i32
    return %c0_i32, %c0_i32_0 : i32, i32
  }
  func.func @transform_6(%arg0: i32) -> (i32, i32) {
    %c0_i32 = arith.constant 0 : i32
    %c0_i32_0 = arith.constant 0 : i32
    return %arg0, %c0_i32 : i32, i32
  }
}

</mosaic_0001>

<llo_original>
// kernel: tpu_custom_call.1
$region0: #{tpu_custom_call.1}
  #allocation0 [shape = 'u32[]', space=smem, size = 0x4, offset = 0x4, fixed_abs, tag = 'smem constant byte address 0x4 - core index']
  #allocation1 [shape = 'u32[144,128]{1,0:T(1,128)}', space=vmem, size = 0x12000, scoped, tag = 'internal scratch']
  %s0 = inlined_call_operand.hbm [shape: f32[256,128], index: 0, kind: input, shape index: {}]
  %s1 = inlined_call_operand.hbm [shape: f32[128,128], index: 1, kind: input, shape index: {}]
  %s2 = inlined_call_operand.vmem [shape: f32[1,128], index: 2, kind: input, shape index: {}]
  %s3 = inlined_call_operand.hbm [shape: f32[128,1024], index: 3, kind: input, shape index: {}]
  %s4 = inlined_call_operand.vmem [shape: f32[1,1024], index: 4, kind: input, shape index: {}]
  %s5 = inlined_call_operand.vmem [shape: f32[8,128], index: 5, kind: input, shape index: {}]
  %s6 = inlined_call_operand.hbm [shape: f32[16,1024], index: 6, kind: output, shape index: {}]
  %s7 = sld [smem:[#allocation0]]
  $region69: #{tpu_custom_call.1} parent=0
    _
  %s9 = ssub.s32 1, %s7
  %s10 = scalar_select 0, %s9, %s7
  $region1: #{tpu_custom_call.1} parent=0
    #allocation2 [shape = 'u8[131072]{0}', space=vmem, size = 0x20000, scoped, tag = 'input window, operand 0']
    #allocation3 [shape = 's32[2]{0}', space=sflag, size = 0x8, scoped, tag = 'scoped memory for tpu_custom_call.1']
    #allocation4 [shape = 's32[2]{0}', space=sflag, size = 0x8, scoped, tag = 'scoped memory for tpu_custom_call.1']
    #allocation5 [shape = 'u8[65536]{0}', space=vmem, size = 0x10000, scoped, tag = 'input window, operand 1, single buffered']
    #allocation6 [shape = 's32[1]{0}', space=sflag, size = 0x4, scoped, tag = 'scoped memory for tpu_custom_call.1']
    #allocation7 [shape = 'u8[524288]{0}', space=vmem, size = 0x80000, scoped, tag = 'input window, operand 3, single buffered']
    #allocation8 [shape = 'u8[65536]{0}', space=vmem, size = 0x10000, scoped, tag = 'output window, operand 0']
    %11 = vsyncpa [#allocation3], 0
    %s12 = scalar_lea.sflag [#allocation3], 1
    %13 = vsyncpa %s12, 0
    %14 = vsyncpa [#allocation6], 0
    %15 = vsyncpa [#allocation4], 0
    %s16 = scalar_lea.sflag [#allocation4], 1
    %17 = vsyncpa %s16, 0
    loop: start=0, step=1, limit=4
    $region2: #{tpu_custom_call.1} parent=1 // loop_pre_header
      _
    $region3: #{tpu_custom_call.1} parent=1 // loop_header
      %s19 = sphi 0, %s23
      %p20 = scmp.ge.s32.totalorder %s19, 4
      %s29 = sphi 0, %s31
      %s32 = sphi 0, %s29
      %s33 = sphi 0, %s32
      %s49 = sphi 0, %s33
      %s53 = sphi 0, %s53
      %s55 = sphi 0, %s53
      %s56 = sphi 0, %s55
      %s70 = sphi 0, %s56
      %s74 = sphi 0, %s74
      %s76 = sphi 0, %s74
      %s77 = sphi 0, %s76
      %s91 = sphi 0, %s77
      %s95 = sphi 0, %s95
      %s97 = sphi 0, %s95
      %s98 = sphi 0, %s97
      %s112 = sphi 0, %s98
      %s116 = sphi 0, %s116
      %s118 = sphi 0, %s116
      %s119 = sphi 0, %s118
      %s133 = sphi 0, %s119
      %s137 = sphi 0, %s137
      %s139 = sphi 0, %s137
      %s140 = sphi 0, %s139
      %s154 = sphi 0, %s140
      %s160 = sphi 0, %s162
      %s163 = sphi 0, %s160
      %s164 = sphi 0, %s163
      %s180 = sphi 0, %s164
    $region4: #{tpu_custom_call.1} parent=1 // loop_header_branch
      %22 = sbr.rel (%p20) target = $region8
    $region5: #{tpu_custom_call.1} parent=1 // loop_body
      %s24 = ssub.s32 %s19, 1
      %s25 = ssub.s32 %s19, 2
      %s26 = sadd.s32 %s19, 1
      %s27 = ssub.s32 %s19, %s26
      %p28 = scmp.eq.s32.totalorder %s27, 0
      %s30 = sadd.s32 %s29, 1
      %s31 = scalar_select %p28, %s29, %s30
      %p34 = pneg %p28
      %p35 = scmp.eq.s32.totalorder %s19, 1
      %p36 = por %p34, %p35
      %p37 = scmp.ne.s32.totalorder %s29, %s32
      %p38 = scmp.eq.s32.totalorder %s19, 0
      %p39 = por %p37, %p38
      %p40 = scmp.ne.s32.totalorder %s29, %s32
      %p41 = scmp.eq.s32.totalorder %s24, 1
      %p42 = por %p40, %p41
      %p43 = scmp.ne.s32.totalorder %s32, %s33
      %p44 = scmp.eq.s32.totalorder %s24, 0
      %p45 = por %p43, %p44
      %p46 = scmp.ne.s32.totalorder %s32, %s33
      %p47 = scmp.eq.s32.totalorder %s25, 1
      %p48 = por %p46, %p47
      %p50 = scmp.ne.s32.totalorder %s33, %s49
      %p51 = scmp.eq.s32.totalorder %s25, 0
      %p52 = por %p50, %p51
      %s54 = sadd.s32 %s53, 1
      %p57 = scmp.eq.s32.totalorder %s19, 1
      %p58 = scmp.ne.s32.totalorder %s53, %s55
      %p59 = scmp.eq.s32.totalorder %s19, 0
      %p60 = por %p58, %p59
      %p61 = scmp.ne.s32.totalorder %s53, %s55
      %p62 = scmp.eq.s32.totalorder %s24, 1
      %p63 = por %p61, %p62
      %p64 = scmp.ne.s32.totalorder %s55, %s56
      %p65 = scmp.eq.s32.totalorder %s24, 0
      %p66 = por %p64, %p65
      %p67 = scmp.ne.s32.totalorder %s55, %s56
      %p68 = scmp.eq.s32.totalorder %s25, 1
      %p69 = por %p67, %p68
      %p71 = scmp.ne.s32.totalorder %s56, %s70
      %p72 = scmp.eq.s32.totalorder %s25, 0
      %p73 = por %p71, %p72
      %s75 = sadd.s32 %s74, 1
      %p78 = scmp.eq.s32.totalorder %s19, 1
      %p79 = scmp.ne.s32.totalorder %s74, %s76
      %p80 = scmp.eq.s32.totalorder %s19, 0
      %p81 = por %p79, %p80
      %p82 = scmp.ne.s32.totalorder %s74, %s76
      %p83 = scmp.eq.s32.totalorder %s24, 1
      %p84 = por %p82, %p83
      %p85 = scmp.ne.s32.totalorder %s76, %s77
      %p86 = scmp.eq.s32.totalorder %s24, 0
      %p87 = por %p85, %p86
      %p88 = scmp.ne.s32.totalorder %s76, %s77
      %p89 = scmp.eq.s32.totalorder %s25, 1
      %p90 = por %p88, %p89
      %p92 = scmp.ne.s32.totalorder %s77, %s91
      %p93 = scmp.eq.s32.totalorder %s25, 0
      %p94 = por %p92, %p93
      %s96 = sadd.s32 %s95, 1
      %p99 = scmp.eq.s32.totalorder %s19, 1
      %p100 = scmp.ne.s32.totalorder %s95, %s97
      %p101 = scmp.eq.s32.totalorder %s19, 0
      %p102 = por %p100, %p101
      %p103 = scmp.ne.s32.totalorder %s95, %s97
      %p104 = scmp.eq.s32.totalorder %s24, 1
      %p105 = por %p103, %p104
      %p106 = scmp.ne.s32.totalorder %s97, %s98
      %p107 = scmp.eq.s32.totalorder %s24, 0
      %p108 = por %p106, %p107
      %p109 = scmp.ne.s32.totalorder %s97, %s98
      %p110 = scmp.eq.s32.totalorder %s25, 1
      %p111 = por %p109, %p110
      %p113 = scmp.ne.s32.totalorder %s98, %s112
      %p114 = scmp.eq.s32.totalorder %s25, 0
      %p115 = por %p113, %p114
      %s117 = sadd.s32 %s116, 1
      %p120 = scmp.eq.s32.totalorder %s19, 1
      %p121 = scmp.ne.s32.totalorder %s116, %s118
      %p122 = scmp.eq.s32.totalorder %s19, 0
      %p123 = por %p121, %p122
      %p124 = scmp.ne.s32.totalorder %s116, %s118
      %p125 = scmp.eq.s32.totalorder %s24, 1
      %p126 = por %p124, %p125
      %p127 = scmp.ne.s32.totalorder %s118, %s119
      %p128 = scmp.eq.s32.totalorder %s24, 0
      %p129 = por %p127, %p128
      %p130 = scmp.ne.s32.totalorder %s118, %s119
      %p131 = scmp.eq.s32.totalorder %s25, 1
      %p132 = por %p130, %p131
      %p134 = scmp.ne.s32.totalorder %s119, %s133
      %p135 = scmp.eq.s32.totalorder %s25, 0
      %p136 = por %p134, %p135
      %s138 = sadd.s32 %s137, 1
      %p141 = scmp.eq.s32.totalorder %s19, 1
      %p142 = scmp.ne.s32.totalorder %s137, %s139
      %p143 = scmp.eq.s32.totalorder %s19, 0
      %p144 = por %p142, %p143
      %p145 = scmp.ne.s32.totalorder %s137, %s139
      %p146 = scmp.eq.s32.totalorder %s24, 1
      %p147 = por %p145, %p146
      %p148 = scmp.ne.s32.totalorder %s139, %s140
      %p149 = scmp.eq.s32.totalorder %s24, 0
      %p150 = por %p148, %p149
      %p151 = scmp.ne.s32.totalorder %s139, %s140
      %p152 = scmp.eq.s32.totalorder %s25, 1
      %p153 = por %p151, %p152
      %p155 = scmp.ne.s32.totalorder %s140, %s154
      %p156 = scmp.eq.s32.totalorder %s25, 0
      %p157 = por %p155, %p156
      %s158 = ssub.s32 %s19, %s26
      %p159 = scmp.eq.s32.totalorder %s158, 0
      %s161 = sadd.s32 %s160, 1
      %s162 = scalar_select %p159, %s160, %s161
      %p165 = pneg %p159
      %p166 = scmp.eq.s32.totalorder %s19, 1
      %p167 = por %p165, %p166
      %p168 = scmp.ne.s32.totalorder %s160, %s163
      %p169 = scmp.eq.s32.totalorder %s19, 0
      %p170 = por %p168, %p169
      %p171 = scmp.ne.s32.totalorder %s160, %s163
      %p172 = scmp.eq.s32.totalorder %s24, 1
      %p173 = por %p171, %p172
      %p174 = scmp.ne.s32.totalorder %s163, %s164
      %p175 = scmp.eq.s32.totalorder %s24, 0
      %p176 = por %p174, %p175
      %p177 = scmp.ne.s32.totalorder %s163, %s164
      %p178 = scmp.eq.s32.totalorder %s25, 1
      %p179 = por %p177, %p178
      %p181 = scmp.ne.s32.totalorder %s164, %s180
      %p182 = scmp.eq.s32.totalorder %s25, 0
      %p183 = por %p181, %p182
      %p184 = scmp.le.s32.totalorder 1, %s19
      %p185 = scmp.lt.s32.totalorder %s19, 3
      %p186 = pnand %p184, %p185
      %p187 = pneg %p186
      // Predicated region
      $region9: #{tpu_custom_call.1} parent=5 // pred_check
        _
      $region10: #{tpu_custom_call.1} parent=5 // pred_check_branch
        %189 = sbr.rel (%p186) target = $region12
      $region11: #{tpu_custom_call.1} parent=5 // pred_region
        %s190 = ssub.s32 %s19, 1
        // Predicated region
        $region13: #{tpu_custom_call.1} parent=11 // pred_check
          %p191 = pneg %p66
        $region14: #{tpu_custom_call.1} parent=11 // pred_check_branch
          %193 = sbr.rel (%p191) target = $region16
        $region15: #{tpu_custom_call.1} parent=11 // pred_region
          %s195 = ssub.s32 2048, 2048
          %196 = vsyncadd [#allocation6], %s195
          %s197 = sshll.u32 [#allocation5], 4
          %s198 = int_to_ptr.vmem [resolvable:$true] %s197
          %203 = dma.hbm_to_vmem [thread:$0]  %s1, 2048, %s198, [#allocation6], 128, 128, 8
        $region16: #{tpu_custom_call.1} parent=11 // pred_fallthru
          _
        // Predicated region
        $region17: #{tpu_custom_call.1} parent=11 // pred_check
          %p204 = pneg %p87
        $region18: #{tpu_custom_call.1} parent=11 // pred_check_branch
          %206 = sbr.rel (%p204) target = $region20
        $region19: #{tpu_custom_call.1} parent=11 // pred_region
          _
        $region20: #{tpu_custom_call.1} parent=11 // pred_fallthru
          _
        // Predicated region
        $region21: #{tpu_custom_call.1} parent=11 // pred_check
          %p207 = pneg %p108
        $region22: #{tpu_custom_call.1} parent=11 // pred_check_branch
          %209 = sbr.rel (%p207) target = $region24
        $region23: #{tpu_custom_call.1} parent=11 // pred_region
          %s211 = ssub.s32 16384, 16384
          %212 = vsyncadd [#allocation6], %s211
          %s213 = sshll.u32 [#allocation7], 4
          %s214 = int_to_ptr.vmem [resolvable:$true] %s213
          %219 = dma.hbm_to_vmem [thread:$0]  %s3, 16384, %s214, [#allocation6], 1024, 1024, 64
        $region24: #{tpu_custom_call.1} parent=11 // pred_fallthru
          _
        // Predicated region
        $region25: #{tpu_custom_call.1} parent=11 // pred_check
          %p220 = pneg %p129
        $region26: #{tpu_custom_call.1} parent=11 // pred_check_branch
          %222 = sbr.rel (%p220) target = $region28
        $region27: #{tpu_custom_call.1} parent=11 // pred_region
          _
        $region28: #{tpu_custom_call.1} parent=11 // pred_fallthru
          _
        // Predicated region
        $region29: #{tpu_custom_call.1} parent=11 // pred_check
          %p223 = pneg %p150
        $region30: #{tpu_custom_call.1} parent=11 // pred_check_branch
          %225 = sbr.rel (%p223) target = $region32
        $region31: #{tpu_custom_call.1} parent=11 // pred_region
          _
        $region32: #{tpu_custom_call.1} parent=11 // pred_fallthru
          _
      $region12: #{tpu_custom_call.1} parent=5 // pred_fallthru
        _
      %p226 = scmp.lt.s32.totalorder %s19, 2
      // Predicated region
      $region33: #{tpu_custom_call.1} parent=5 // pred_check
        %p227 = pneg %p226
      $region34: #{tpu_custom_call.1} parent=5 // pred_check_branch
        %229 = sbr.rel (%p227) target = $region36
      $region35: #{tpu_custom_call.1} parent=5 // pred_region
        // Predicated region
        $region37: #{tpu_custom_call.1} parent=35 // pred_check
          %p230 = pneg %p39
        $region38: #{tpu_custom_call.1} parent=35 // pred_check_branch
          %232 = sbr.rel (%p230) target = $region40
        $region39: #{tpu_custom_call.1} parent=35 // pred_region
          %s233 = sand.u32 %s29, 1
          %s234 = scalar_lea.sflag [#allocation3], %s233
          %s235 = sand.u32 %s29, 1
          %s236 = smul.addr %s235, 128
          %s237 = scalar_lea.vmem [#allocation2], %s236
          %s238 = smul.u32 16, %s19
          %s240 = ssub.s32 2048, 2048
          %241 = vsyncadd %s234, %s240
          %s242 = smul.addr %s238, 128
          %s243 = scalar_lea.hbm %s0, %s242
          %s244 = sshll.u32 %s237, 4
          %s245 = int_to_ptr.vmem [resolvable:$true] %s244
          %250 = dma.hbm_to_vmem [thread:$0]  %s243, 2048, %s245, %s234, 128, 128, 8
        $region40: #{tpu_custom_call.1} parent=35 // pred_fallthru
          _
      $region36: #{tpu_custom_call.1} parent=5 // pred_fallthru
        _
      %p251 = scmp.le.s32.totalorder 1, %s19
      %p252 = scmp.lt.s32.totalorder %s19, 3
      %p253 = pnand %p251, %p252
      %p254 = pneg %p253
      // Predicated region
      $region41: #{tpu_custom_call.1} parent=5 // pred_check
        _
      $region42: #{tpu_custom_call.1} parent=5 // pred_check_branch
        %256 = sbr.rel (%p253) target = $region44
      $region43: #{tpu_custom_call.1} parent=5 // pred_region
        %s257 = ssub.s32 %s19, 1
        %s258 = sand.u32 %s32, 1
        %s259 = scalar_lea.sflag [#allocation3], %s258
        %s260 = sand.u32 %s32, 1
        %s261 = smul.addr %s260, 128
        %s262 = scalar_lea.vmem [#allocation2], %s261
        // Predicated region
        $region45: #{tpu_custom_call.1} parent=43 // pred_check
          %p263 = pneg %p45
        $region46: #{tpu_custom_call.1} parent=43 // pred_check_branch
          %265 = sbr.rel (%p263) target = $region48
        $region47: #{tpu_custom_call.1} parent=43 // pred_region
          %266 = dma.done %s259, 2048
        $region48: #{tpu_custom_call.1} parent=43 // pred_fallthru
          _
        // Predicated region
        $region49: #{tpu_custom_call.1} parent=43 // pred_check
          %p267 = pneg %p66
        $region50: #{tpu_custom_call.1} parent=43 // pred_check_branch
          %269 = sbr.rel (%p267) target = $region52
        $region51: #{tpu_custom_call.1} parent=43 // pred_region
          %270 = dma.done [#allocation6], 2048
        $region52: #{tpu_custom_call.1} parent=43 // pred_fallthru
          _
        // Predicated region
        $region53: #{tpu_custom_call.1} parent=43 // pred_check
          %p271 = pneg %p108
        $region54: #{tpu_custom_call.1} parent=43 // pred_check_branch
          %273 = sbr.rel (%p271) target = $region56
        $region55: #{tpu_custom_call.1} parent=43 // pred_region
          %274 = dma.done [#allocation6], 16384
        $region56: #{tpu_custom_call.1} parent=43 // pred_fallthru
          _
        %s275 = sand.u32 %s32, 1
        %s276 = scalar_lea.sflag [#allocation3], %s275
        %s277 = sand.u32 %s32, 1
        %s278 = smul.addr %s277, 128
        %s279 = scalar_lea.vmem [#allocation2], %s278
        %p280 = pneg %p45
        %p281 = pneg %p42
        %p282 = pneg %p66
        %p283 = pneg %p63
        %p284 = pneg %p87
        %p285 = pneg %p84
        %p286 = pneg %p108
        %p287 = pneg %p105
        %p288 = pneg %p129
        %p289 = pneg %p126
        %p290 = pneg %p150
        %p291 = pneg %p147
        %p292 = pneg %p176
        %p293 = pneg %p173
        %s294 = sand.u32 %s163, 1
        %s295 = scalar_lea.sflag [#allocation4], %s294
        %s296 = sand.u32 %s163, 1
        %s297 = smul.addr %s296, 64
        %s298 = scalar_lea.vmem [#allocation8], %s297
        %s299 = smul.u32 16, %s24
        %v300 = vld [vmem:[%s262] sm:$0xff]
        %v301 = vld [vmem:[%s262 + $0x8] sm:$0xff]
        %v302 = vld [vmem:[%s262 + $0x10] sm:$0xff]
        %v303 = vld [vmem:[%s262 + $0x18] sm:$0xff]
        %v304 = vld [vmem:[%s262 + $0x20] sm:$0xff]
        %v305 = vld [vmem:[%s262 + $0x28] sm:$0xff]
        %v306 = vld [vmem:[%s262 + $0x30] sm:$0xff]
        %v307 = vld [vmem:[%s262 + $0x38] sm:$0xff]
        %v308 = vld [vmem:[%s262 + $0x40] sm:$0xff]
        %v309 = vld [vmem:[%s262 + $0x48] sm:$0xff]
        %v310 = vld [vmem:[%s262 + $0x50] sm:$0xff]
        %v311 = vld [vmem:[%s262 + $0x58] sm:$0xff]
        %v312 = vld [vmem:[%s262 + $0x60] sm:$0xff]
        %v313 = vld [vmem:[%s262 + $0x68] sm:$0xff]
        %v314 = vld [vmem:[%s262 + $0x70] sm:$0xff]
        %v315 = vld [vmem:[%s262 + $0x78] sm:$0xff]
        %v316 = vld [vmem:[#allocation5] sm:$0xff]
        %v317 = vld [vmem:[#allocation5 + $0x8] sm:$0xff]
        %v318 = vld [vmem:[#allocation5 + $0x10] sm:$0xff]
        %v319 = vld [vmem:[#allocation5 + $0x18] sm:$0xff]
        %v320 = vld [vmem:[#allocation5 + $0x20] sm:$0xff]
        %v321 = vld [vmem:[#allocation5 + $0x28] sm:$0xff]
        %v322 = vld [vmem:[#allocation5 + $0x30] sm:$0xff]
        %v323 = vld [vmem:[#allocation5 + $0x38] sm:$0xff]
        %v324 = vld [vmem:[#allocation5 + $0x40] sm:$0xff]
        %v325 = vld [vmem:[#allocation5 + $0x48] sm:$0xff]
        %v326 = vld [vmem:[#allocation5 + $0x50] sm:$0xff]
        %v327 = vld [vmem:[#allocation5 + $0x58] sm:$0xff]
        %v328 = vld [vmem:[#allocation5 + $0x60] sm:$0xff]
        %v329 = vld [vmem:[#allocation5 + $0x68] sm:$0xff]
        %v330 = vld [vmem:[#allocation5 + $0x70] sm:$0xff]
        %v331 = vld [vmem:[#allocation5 + $0x78] sm:$0xff]
        %v332 = vld [vmem:[%s2] sm:$0x1]
        %v334 = vlaneseq
        %v335 = vshrl.u32 %v334, 7
        %v336 = vsub.s32 0, %v335
        %v337 = vrot.slane %v332, %v336
        %339 = vmatprep.subr.mxu0 0.0
        %340 = vmatpush1.msra.mxu0 %v316
        %341 = vmatprep.subr.mxu0 0.0
        %342 = vmatpush1.msra.mxu0 %v317
        %343 = vmatprep.subr.mxu0 0.0
        %344 = vmatpush1.msra.mxu0 %v318
        %345 = vmatprep.subr.mxu0 0.0
        %346 = vmatpush1.msra.mxu0 %v319
        %347 = vmatprep.subr.mxu0 0.0
        %348 = vmatpush1.msra.mxu0 %v320
        %349 = vmatprep.subr.mxu0 0.0
        %350 = vmatpush1.msra.mxu0 %v321
        %351 = vmatprep.subr.mxu0 0.0
        %352 = vmatpush1.msra.mxu0 %v322
        %353 = vmatprep.subr.mxu0 0.0
        %354 = vmatpush1.msra.mxu0 %v323
        %355 = vmatprep.subr.mxu0 0.0
        %356 = vmatpush1.msra.mxu0 %v324
        %357 = vmatprep.subr.mxu0 0.0
        %358 = vmatpush1.msra.mxu0 %v325
        %359 = vmatprep.subr.mxu0 0.0
        %360 = vmatpush1.msra.mxu0 %v326
        %361 = vmatprep.subr.mxu0 0.0
        %362 = vmatpush1.msra.mxu0 %v327
        %363 = vmatprep.subr.mxu0 0.0
        %364 = vmatpush1.msra.mxu0 %v328
        %365 = vmatprep.subr.mxu0 0.0
        %366 = vmatpush1.msra.mxu0 %v329
        %367 = vmatprep.subr.mxu0 0.0
        %368 = vmatpush1.msra.mxu0 %v330
        %369 = vmatprep.subr.mxu0 0.0
        %370 = vmatpush1.msra.mxu0 %v331
        %371 = vmatprep.subr.mxu0 0.0
        %372 = vmatpush1.msra.mxu0 0.0
        %373 = vmatprep.subr.mxu0 0.0
        %374 = vmatpush1.msra.mxu0 0.0
        %375 = vmatprep.subr.mxu0 0.0
        %376 = vmatpush1.msra.mxu0 0.0
        %377 = vmatprep.subr.mxu0 0.0
        %378 = vmatpush1.msra.mxu0 0.0
        %379 = vmatprep.subr.mxu0 0.0
        %380 = vmatpush1.msra.mxu0 0.0
        %381 = vmatprep.subr.mxu0 0.0
        %382 = vmatpush1.msra.mxu0 0.0
        %383 = vmatprep.subr.mxu0 0.0
        %384 = vmatpush1.msra.mxu0 0.0
        %385 = vmatprep.subr.mxu0 0.0
        %386 = vmatpush1.msra.mxu0 0.0
        %387 = vmatprep.subr.mxu0 0.0
        %388 = vmatpush1.msra.mxu0 0.0
        %389 = vmatprep.subr.mxu0 0.0
        %390 = vmatpush1.msra.mxu0 0.0
        %391 = vmatprep.subr.mxu0 0.0
        %392 = vmatpush1.msra.mxu0 0.0
        %393 = vmatprep.subr.mxu0 0.0
        %394 = vmatpush1.msra.mxu0 0.0
        %395 = vmatprep.subr.mxu0 0.0
        %396 = vmatpush1.msra.mxu0 0.0
        %397 = vmatprep.subr.mxu0 0.0
        %398 = vmatpush1.msra.mxu0 0.0
        %399 = vmatprep.subr.mxu0 0.0
        %400 = vmatpush1.msra.mxu0 0.0
        %401 = vmatprep.subr.mxu0 0.0
        %402 = vmatpush1.msra.mxu0 0.0
        %403 = vmatprep.mubr.f32.mxu0 0.0
        %404 = vmatmul.mubr.f32.gmra.mrb[0].mxu0 %v300
        %v405 = vpop.f32.mrb[0].mxu0
        %v406 = vadd.f32 %v337, %v405
        %v407 = vpop.f32.mrb[0].mxu0
        %408 = vmatprep.mubr.f32.mxu0 0.0
        %409 = vmatmul.mubr.f32.gmra.mrb[0].mxu0 %v301
        %v410 = vpop.f32.mrb[0].mxu0
        %v411 = vadd.f32 %v337, %v410
        %v412 = vpop.f32.mrb[0].mxu0
        %413 = vmatprep.mubr.f32.mxu0 0.0
        %414 = vmatmul.mubr.f32.gmra.mrb[0].mxu0 %v302
        %v415 = vpop.f32.mrb[0].mxu0
        %v416 = vadd.f32 %v337, %v415
        %v417 = vpop.f32.mrb[0].mxu0
        %418 = vmatprep.mubr.f32.mxu0 0.0
        %419 = vmatmul.mubr.f32.gmra.mrb[0].mxu0 %v303
        %v420 = vpop.f32.mrb[0].mxu0
        %v421 = vadd.f32 %v337, %v420
        %v422 = vpop.f32.mrb[0].mxu0
        %423 = vmatprep.mubr.f32.mxu0 0.0
        %424 = vmatmul.mubr.f32.gmra.mrb[0].mxu0 %v304
        %v425 = vpop.f32.mrb[0].mxu0
        %v426 = vadd.f32 %v337, %v425
        %v427 = vpop.f32.mrb[0].mxu0
        %428 = vmatprep.mubr.f32.mxu0 0.0
        %429 = vmatmul.mubr.f32.gmra.mrb[0].mxu0 %v305
        %v430 = vpop.f32.mrb[0].mxu0
        %v431 = vadd.f32 %v337, %v430
        %v432 = vpop.f32.mrb[0].mxu0
        %433 = vmatprep.mubr.f32.mxu0 0.0
        %434 = vmatmul.mubr.f32.gmra.mrb[0].mxu0 %v306
        %v435 = vpop.f32.mrb[0].mxu0
        %v436 = vadd.f32 %v337, %v435
        %v437 = vpop.f32.mrb[0].mxu0
        %438 = vmatprep.mubr.f32.mxu0 0.0
        %439 = vmatmul.mubr.f32.gmra.mrb[0].mxu0 %v307
        %v440 = vpop.f32.mrb[0].mxu0
        %v441 = vadd.f32 %v337, %v440
        %v442 = vpop.f32.mrb[0].mxu0
        %443 = vmatprep.mubr.f32.mxu0 0.0
        %444 = vmatmul.mubr.f32.gmra.mrb[0].mxu0 %v308
        %v445 = vpop.f32.mrb[0].mxu0
        %v446 = vadd.f32 %v337, %v445
        %v447 = vpop.f32.mrb[0].mxu0
        %448 = vmatprep.mubr.f32.mxu0 0.0
        %449 = vmatmul.mubr.f32.gmra.mrb[0].mxu0 %v309
        %v450 = vpop.f32.mrb[0].mxu0
        %v451 = vadd.f32 %v337, %v450
        %v452 = vpop.f32.mrb[0].mxu0
        %453 = vmatprep.mubr.f32.mxu0 0.0
        %454 = vmatmul.mubr.f32.gmra.mrb[0].mxu0 %v310
        %v455 = vpop.f32.mrb[0].mxu0
        %v456 = vadd.f32 %v337, %v455
        %v457 = vpop.f32.mrb[0].mxu0
        %458 = vmatprep.mubr.f32.mxu0 0.0
        %459 = vmatmul.mubr.f32.gmra.mrb[0].mxu0 %v311
        %v460 = vpop.f32.mrb[0].mxu0
        %v461 = vadd.f32 %v337, %v460
        %v462 = vpop.f32.mrb[0].mxu0
        %463 = vmatprep.mubr.f32.mxu0 0.0
        %464 = vmatmul.mubr.f32.gmra.mrb[0].mxu0 %v312
        %v465 = vpop.f32.mrb[0].mxu0
        %v466 = vadd.f32 %v337, %v465
        %v467 = vpop.f32.mrb[0].mxu0
        %468 = vmatprep.mubr.f32.mxu0 0.0
        %469 = vmatmul.mubr.f32.gmra.mrb[0].mxu0 %v313
        %v470 = vpop.f32.mrb[0].mxu0
        %v471 = vadd.f32 %v337, %v470
        %v472 = vpop.f32.mrb[0].mxu0
        %473 = vmatprep.mubr.f32.mxu0 0.0
        %474 = vmatmul.mubr.f32.gmra.mrb[0].mxu0 %v314
        %v475 = vpop.f32.mrb[0].mxu0
        %v476 = vadd.f32 %v337, %v475
        %v477 = vpop.f32.mrb[0].mxu0
        %478 = vmatprep.mubr.f32.mxu0 0.0
        %479 = vmatmul.mubr.f32.gmra.mrb[0].mxu0 %v315
        %v480 = vpop.f32.mrb[0].mxu0
        %v481 = vadd.f32 %v337, %v480
        %v482 = vpop.f32.mrb[0].mxu0
        %483 = vdwg.mxu0
        %v484 = vmax.f32 %v406, 0.0
        %v485 = vmax.f32 %v411, 0.0
        %v486 = vmax.f32 %v416, 0.0
        %v487 = vmax.f32 %v421, 0.0
        %v488 = vmax.f32 %v426, 0.0
        %v489 = vmax.f32 %v431, 0.0
        %v490 = vmax.f32 %v436, 0.0
        %v491 = vmax.f32 %v441, 0.0
        %v492 = vmax.f32 %v446, 0.0
        %v493 = vmax.f32 %v451, 0.0
        %v494 = vmax.f32 %v456, 0.0
        %v495 = vmax.f32 %v461, 0.0
        %v496 = vmax.f32 %v466, 0.0
        %v497 = vmax.f32 %v471, 0.0
        %v498 = vmax.f32 %v476, 0.0
        %v499 = vmax.f32 %v481, 0.0
        %v500 = vld [vmem:[%s5] sm:$0xff]
        %501 = vmatprep.subr.mxu0 0.0
        %502 = vmatpush1.msra.mxu0 %v484
        %503 = vmatprep.subr.mxu0 0.0
        %504 = vmatpush1.msra.mxu0 %v485
        %505 = vmatprep.subr.mxu0 0.0
        %506 = vmatpush1.msra.mxu0 %v486
        %507 = vmatprep.subr.mxu0 0.0
        %508 = vmatpush1.msra.mxu0 %v487
        %509 = vmatprep.subr.mxu0 0.0
        %510 = vmatpush1.msra.mxu0 %v488
        %511 = vmatprep.subr.mxu0 0.0
        %512 = vmatpush1.msra.mxu0 %v489
        %513 = vmatprep.subr.mxu0 0.0
        %514 = vmatpush1.msra.mxu0 %v490
        %515 = vmatprep.subr.mxu0 0.0
        %516 = vmatpush1.msra.mxu0 %v491
        %517 = vmatprep.subr.mxu0 0.0
        %518 = vmatpush1.msra.mxu0 %v492
        %519 = vmatprep.subr.mxu0 0.0
        %520 = vmatpush1.msra.mxu0 %v493
        %521 = vmatprep.subr.mxu0 0.0
        %522 = vmatpush1.msra.mxu0 %v494
        %523 = vmatprep.subr.mxu0 0.0
        %524 = vmatpush1.msra.mxu0 %v495
        %525 = vmatprep.subr.mxu0 0.0
        %526 = vmatpush1.msra.mxu0 %v496
        %527 = vmatprep.subr.mxu0 0.0
        %528 = vmatpush1.msra.mxu0 %v497
        %529 = vmatprep.subr.mxu0 0.0
        %530 = vmatpush1.msra.mxu0 %v498
        %531 = vmatprep.subr.mxu0 0.0
        %532 = vmatpush1.msra.mxu0 %v499
        %533 = vmatprep.subr.mxu0 0.0
        %534 = vmatpush1.msra.mxu0 0.0
        %535 = vmatprep.subr.mxu0 0.0
        %536 = vmatpush1.msra.mxu0 0.0
        %537 = vmatprep.subr.mxu0 0.0
        %538 = vmatpush1.msra.mxu0 0.0
        %539 = vmatprep.subr.mxu0 0.0
        %540 = vmatpush1.msra.mxu0 0.0
        %541 = vmatprep.subr.mxu0 0.0
        %542 = vmatpush1.msra.mxu0 0.0
        %543 = vmatprep.subr.mxu0 0.0
        %544 = vmatpush1.msra.mxu0 0.0
        %545 = vmatprep.subr.mxu0 0.0
        %546 = vmatpush1.msra.mxu0 0.0
        %547 = vmatprep.subr.mxu0 0.0
        %548 = vmatpush1.msra.mxu0 0.0
        %549 = vmatprep.subr.mxu0 0.0
        %550 = vmatpush1.msra.mxu0 0.0
        %551 = vmatprep.subr.mxu0 0.0
        %552 = vmatpush1.msra.mxu0 0.0
        %553 = vmatprep.subr.mxu0 0.0
        %554 = vmatpush1.msra.mxu0 0.0
        %555 = vmatprep.subr.mxu0 0.0
        %556 = vmatpush1.msra.mxu0 0.0
        %557 = vmatprep.subr.mxu0 0.0
        %558 = vmatpush1.msra.mxu0 0.0
        %559 = vmatprep.subr.mxu0 0.0
        %560 = vmatpush1.msra.mxu0 0.0
        %561 = vmatprep.subr.mxu0 0.0
        %562 = vmatpush1.msra.mxu0 0.0
        %563 = vmatprep.subr.mxu0 0.0
        %564 = vmatpush1.msra.mxu0 0.0
        %565 = vmatprep.mubr.f32.mxu0 0.0
        %566 = vmatmul.mubr.f32.gmra.mrb[0].mxu0 %v500
        %v567 = vpop.f32.mrb[0].mxu0
        %v568 = vadd.f32 0.0, %v567
        %v569 = vpop.f32.mrb[0].mxu0
        %570 = vdwg.mxu0
        %v571 = vld [vmem:[#allocation7] sm:$0xff]
        %v572 = vld [vmem:[#allocation7 + $0x8] sm:$0xff]
        %v573 = vld [vmem:[#allocation7 + $0x10] sm:$0xff]
        %v574 = vld [vmem:[#allocation7 + $0x18] sm:$0xff]
        %v575 = vld [vmem:[#allocation7 + $0x20] sm:$0xff]
        %v576 = vld [vmem:[#allocation7 + $0x28] sm:$0xff]
        %v577 = vld [vmem:[#allocation7 + $0x30] sm:$0xff]
        %v578 = vld [vmem:[#allocation7 + $0x38] sm:$0xff]
        %v579 = vld [vmem:[#allocation7 + $0x40] sm:$0xff]
        %v580 = vld [vmem:[#allocation7 + $0x48] sm:$0xff]
        %v581 = vld [vmem:[#allocation7 + $0x50] sm:$0xff]
        %v582 = vld [vmem:[#allocation7 + $0x58] sm:$0xff]
        %v583 = vld [vmem:[#allocation7 + $0x60] sm:$0xff]
        %v584 = vld [vmem:[#allocation7 + $0x68] sm:$0xff]
        %v585 = vld [vmem:[#allocation7 + $0x70] sm:$0xff]
        %v586 = vld [vmem:[#allocation7 + $0x78] sm:$0xff]
        %v587 = vld [vmem:[#allocation7 + $0x80] sm:$0xff]
        %v588 = vld [vmem:[#allocation7 + $0x88] sm:$0xff]
        %v589 = vld [vmem:[#allocation7 + $0x90] sm:$0xff]
        %v590 = vld [vmem:[#allocation7 + $0x98] sm:$0xff]
        %v591 = vld [vmem:[#allocation7 + $0xa0] sm:$0xff]
        %v592 = vld [vmem:[#allocation7 + $0xa8] sm:$0xff]
        %v593 = vld [vmem:[#allocation7 + $0xb0] sm:$0xff]
        %v594 = vld [vmem:[#allocation7 + $0xb8] sm:$0xff]
        %v595 = vld [vmem:[#allocation7 + $0xc0] sm:$0xff]
        %v596 = vld [vmem:[#allocation7 + $0xc8] sm:$0xff]
        %v597 = vld [vmem:[#allocation7 + $0xd0] sm:$0xff]
        %v598 = vld [vmem:[#allocation7 + $0xd8] sm:$0xff]
        %v599 = vld [vmem:[#allocation7 + $0xe0] sm:$0xff]
        %v600 = vld [vmem:[#allocation7 + $0xe8] sm:$0xff]
        %v601 = vld [vmem:[#allocation7 + $0xf0] sm:$0xff]
        %v602 = vld [vmem:[#allocation7 + $0xf8] sm:$0xff]
        %v603 = vld [vmem:[#allocation7 + $0x100] sm:$0xff]
        %v604 = vld [vmem:[#allocation7 + $0x108] sm:$0xff]
        %v605 = vld [vmem:[#allocation7 + $0x110] sm:$0xff]
        %v606 = vld [vmem:[#allocation7 + $0x118] sm:$0xff]
        %v607 = vld [vmem:[#allocation7 + $0x120] sm:$0xff]
        %v608 = vld [vmem:[#allocation7 + $0x128] sm:$0xff]
        %v609 = vld [vmem:[#allocation7 + $0x130] sm:$0xff]
        %v610 = vld [vmem:[#allocation7 + $0x138] sm:$0xff]
        %v611 = vld [vmem:[#allocation7 + $0x140] sm:$0xff]
        %v612 = vld [vmem:[#allocation7 + $0x148] sm:$0xff]
        %v613 = vld [vmem:[#allocation7 + $0x150] sm:$0xff]
        %v614 = vld [vmem:[#allocation7 + $0x158] sm:$0xff]
        %v615 = vld [vmem:[#allocation7 + $0x160] sm:$0xff]
        %v616 = vld [vmem:[#allocation7 + $0x168] sm:$0xff]
        %v617 = vld [vmem:[#allocation7 + $0x170] sm:$0xff]
        %v618 = vld [vmem:[#allocation7 + $0x178] sm:$0xff]
        %v619 = vld [vmem:[#allocation7 + $0x180] sm:$0xff]
        %v620 = vld [vmem:[#allocation7 + $0x188] sm:$0xff]
        %v621 = vld [vmem:[#allocation7 + $0x190] sm:$0xff]
        %v622 = vld [vmem:[#allocation7 + $0x198] sm:$0xff]
        %v623 = vld [vmem:[#allocation7 + $0x1a0] sm:$0xff]
        %v624 = vld [vmem:[#allocation7 + $0x1a8] sm:$0xff]
        %v625 = vld [vmem:[#allocation7 + $0x1b0] sm:$0xff]
        %v626 = vld [vmem:[#allocation7 + $0x1b8] sm:$0xff]
        %v627 = vld [vmem:[#allocation7 + $0x1c0] sm:$0xff]
        %v628 = vld [vmem:[#allocation7 + $0x1c8] sm:$0xff]
        %v629 = vld [vmem:[#allocation7 + $0x1d0] sm:$0xff]
        %v630 = vld [vmem:[#allocation7 + $0x1d8] sm:$0xff]
        %v631 = vld [vmem:[#allocation7 + $0x1e0] sm:$0xff]
        %v632 = vld [vmem:[#allocation7 + $0x1e8] sm:$0xff]
        %v633 = vld [vmem:[#allocation7 + $0x1f0] sm:$0xff]
        %v634 = vld [vmem:[#allocation7 + $0x1f8] sm:$0xff]
        %v635 = vld [vmem:[#allocation7 + $0x200] sm:$0xff]
        %v636 = vld [vmem:[#allocation7 + $0x208] sm:$0xff]
        %v637 = vld [vmem:[#allocation7 + $0x210] sm:$0xff]
        %v638 = vld [vmem:[#allocation7 + $0x218] sm:$0xff]
        %v639 = vld [vmem:[#allocation7 + $0x220] sm:$0xff]
        %v640 = vld [vmem:[#allocation7 + $0x228] sm:$0xff]
        %v641 = vld [vmem:[#allocation7 + $0x230] sm:$0xff]
        %v642 = vld [vmem:[#allocation7 + $0x238] sm:$0xff]
        %v643 = vld [vmem:[#allocation7 + $0x240] sm:$0xff]
        %v644 = vld [vmem:[#allocation7 + $0x248] sm:$0xff]
        %v645 = vld [vmem:[#allocation7 + $0x250] sm:$0xff]
        %v646 = vld [vmem:[#allocation7 + $0x258] sm:$0xff]
        %v647 = vld [vmem:[#allocation7 + $0x260] sm:$0xff]
        %v648 = vld [vmem:[#allocation7 + $0x268] sm:$0xff]
        %v649 = vld [vmem:[#allocation7 + $0x270] sm:$0xff]
        %v650 = vld [vmem:[#allocation7 + $0x278] sm:$0xff]
        %v651 = vld [vmem:[#allocation7 + $0x280] sm:$0xff]
        %v652 = vld [vmem:[#allocation7 + $0x288] sm:$0xff]
        %v653 = vld [vmem:[#allocation7 + $0x290] sm:$0xff]
        %v654 = vld [vmem:[#allocation7 + $0x298] sm:$0xff]
        %v655 = vld [vmem:[#allocation7 + $0x2a0] sm:$0xff]
        %v656 = vld [vmem:[#allocation7 + $0x2a8] sm:$0xff]
        %v657 = vld [vmem:[#allocation7 + $0x2b0] sm:$0xff]
        %v658 = vld [vmem:[#allocation7 + $0x2b8] sm:$0xff]
        %v659 = vld [vmem:[#allocation7 + $0x2c0] sm:$0xff]
        %v660 = vld [vmem:[#allocation7 + $0x2c8] sm:$0xff]
        %v661 = vld [vmem:[#allocation7 + $0x2d0] sm:$0xff]
        %v662 = vld [vmem:[#allocation7 + $0x2d8] sm:$0xff]
        %v663 = vld [vmem:[#allocation7 + $0x2e0] sm:$0xff]
        %v664 = vld [vmem:[#allocation7 + $0x2e8] sm:$0xff]
        %v665 = vld [vmem:[#allocation7 + $0x2f0] sm:$0xff]
        %v666 = vld [vmem:[#allocation7 + $0x2f8] sm:$0xff]
        %v667 = vld [vmem:[#allocation7 + $0x300] sm:$0xff]
        %v668 = vld [vmem:[#allocation7 + $0x308] sm:$0xff]
        %v669 = vld [vmem:[#allocation7 + $0x310] sm:$0xff]
        %v670 = vld [vmem:[#allocation7 + $0x318] sm:$0xff]
        %v671 = vld [vmem:[#allocation7 + $0x320] sm:$0xff]
        %v672 = vld [vmem:[#allocation7 + $0x328] sm:$0xff]
        %v673 = vld [vmem:[#allocation7 + $0x330] sm:$0xff]
        %v674 = vld [vmem:[#allocation7 + $0x338] sm:$0xff]
        %v675 = vld [vmem:[#allocation7 + $0x340] sm:$0xff]
        %v676 = vld [vmem:[#allocation7 + $0x348] sm:$0xff]
        %v677 = vld [vmem:[#allocation7 + $0x350] sm:$0xff]
        %v678 = vld [vmem:[#allocation7 + $0x358] sm:$0xff]
        %v679 = vld [vmem:[#allocation7 + $0x360] sm:$0xff]
        %v680 = vld [vmem:[#allocation7 + $0x368] sm:$0xff]
        %v681 = vld [vmem:[#allocation7 + $0x370] sm:$0xff]
        %v682 = vld [vmem:[#allocation7 + $0x378] sm:$0xff]
        %v683 = vld [vmem:[#allocation7 + $0x380] sm:$0xff]
        %v684 = vld [vmem:[#allocation7 + $0x388] sm:$0xff]
        %v685 = vld [vmem:[#allocation7 + $0x390] sm:$0xff]
        %v686 = vld [vmem:[#allocation7 + $0x398] sm:$0xff]
        %v687 = vld [vmem:[#allocation7 + $0x3a0] sm:$0xff]
        %v688 = vld [vmem:[#allocation7 + $0x3a8] sm:$0xff]
        %v689 = vld [vmem:[#allocation7 + $0x3b0] sm:$0xff]
        %v690 = vld [vmem:[#allocation7 + $0x3b8] sm:$0xff]
        %v691 = vld [vmem:[#allocation7 + $0x3c0] sm:$0xff]
        %v692 = vld [vmem:[#allocation7 + $0x3c8] sm:$0xff]
        %v693 = vld [vmem:[#allocation7 + $0x3d0] sm:$0xff]
        %v694 = vld [vmem:[#allocation7 + $0x3d8] sm:$0xff]
        %v695 = vld [vmem:[#allocation7 + $0x3e0] sm:$0xff]
        %v696 = vld [vmem:[#allocation7 + $0x3e8] sm:$0xff]
        %v697 = vld [vmem:[#allocation7 + $0x3f0] sm:$0xff]
        %v698 = vld [vmem:[#allocation7 + $0x3f8] sm:$0xff]
        %v699 = vld [vmem:[%s4] sm:$0xff]
        %v701 = vlaneseq
        %v702 = vshrl.u32 %v701, 7
        %v703 = vsub.s32 0, %v702
        %v704 = vrot.slane %v699, %v703
        %v705 = vlaneseq
        %v706 = vshrl.u32 %v705, 7
        %v707 = vsub.s32 1, %v706
        %v708 = vrot.slane %v699, %v707
        %v709 = vlaneseq
        %v710 = vshrl.u32 %v709, 7
        %v711 = vsub.s32 2, %v710
        %v712 = vrot.slane %v699, %v711
        %v713 = vlaneseq
        %v714 = vshrl.u32 %v713, 7
        %v715 = vsub.s32 3, %v714
        %v716 = vrot.slane %v699, %v715
        %v717 = vlaneseq
        %v718 = vshrl.u32 %v717, 7
        %v719 = vsub.s32 4, %v718
        %v720 = vrot.slane %v699, %v719
        %v721 = vlaneseq
        %v722 = vshrl.u32 %v721, 7
        %v723 = vsub.s32 5, %v722
        %v724 = vrot.slane %v699, %v723
        %v725 = vlaneseq
        %v726 = vshrl.u32 %v725, 7
        %v727 = vsub.s32 6, %v726
        %v728 = vrot.slane %v699, %v727
        %v729 = vlaneseq
        %v730 = vshrl.u32 %v729, 7
        %v731 = vsub.s32 7, %v730
        %v732 = vrot.slane %v699, %v731
        %741 = vmatprep.subr.mxu0 %v572
        %742 = vmatpush1.msra.mxu0 %v571
        %743 = vmatprep.subr.mxu0 %v580
        %744 = vmatpush1.msra.mxu0 %v579
        %745 = vmatprep.subr.mxu0 %v588
        %746 = vmatpush1.msra.mxu0 %v587
        %747 = vmatprep.subr.mxu0 %v596
        %748 = vmatpush1.msra.mxu0 %v595
        %749 = vmatprep.subr.mxu0 %v604
        %750 = vmatpush1.msra.mxu0 %v603
        %751 = vmatprep.subr.mxu0 %v612
        %752 = vmatpush1.msra.mxu0 %v611
        %753 = vmatprep.subr.mxu0 %v620
        %754 = vmatpush1.msra.mxu0 %v619
        %755 = vmatprep.subr.mxu0 %v628
        %756 = vmatpush1.msra.mxu0 %v627
        %757 = vmatprep.subr.mxu0 %v636
        %758 = vmatpush1.msra.mxu0 %v635
        %759 = vmatprep.subr.mxu0 %v644
        %760 = vmatpush1.msra.mxu0 %v643
        %761 = vmatprep.subr.mxu0 %v652
        %762 = vmatpush1.msra.mxu0 %v651
        %763 = vmatprep.subr.mxu0 %v660
        %764 = vmatpush1.msra.mxu0 %v659
        %765 = vmatprep.subr.mxu0 %v668
        %766 = vmatpush1.msra.mxu0 %v667
        %767 = vmatprep.subr.mxu0 %v676
        %768 = vmatpush1.msra.mxu0 %v675
        %769 = vmatprep.subr.mxu0 %v684
        %770 = vmatpush1.msra.mxu0 %v683
        %771 = vmatprep.subr.mxu0 %v692
        %772 = vmatpush1.msra.mxu0 %v691
        %773 = vmatprep.subr.mxu0 0.0
        %774 = vmatpush1.msra.mxu0 0.0
        %775 = vmatprep.subr.mxu0 0.0
        %776 = vmatpush1.msra.mxu0 0.0
        %777 = vmatprep.subr.mxu0 0.0
        %778 = vmatpush1.msra.mxu0 0.0
        %779 = vmatprep.subr.mxu0 0.0
        %780 = vmatpush1.msra.mxu0 0.0
        %781 = vmatprep.subr.mxu0 0.0
        %782 = vmatpush1.msra.mxu0 0.0
        %783 = vmatprep.subr.mxu0 0.0
        %784 = vmatpush1.msra.mxu0 0.0
        %785 = vmatprep.subr.mxu0 0.0
        %786 = vmatpush1.msra.mxu0 0.0
        %787 = vmatprep.subr.mxu0 0.0
        %788 = vmatpush1.msra.mxu0 0.0
        %789 = vmatprep.subr.mxu0 0.0
        %790 = vmatpush1.msra.mxu0 0.0
        %791 = vmatprep.subr.mxu0 0.0
        %792 = vmatpush1.msra.mxu0 0.0
        %793 = vmatprep.subr.mxu0 0.0
        %794 = vmatpush1.msra.mxu0 0.0
        %795 = vmatprep.subr.mxu0 0.0
        %796 = vmatpush1.msra.mxu0 0.0
        %797 = vmatprep.subr.mxu0 0.0
        %798 = vmatpush1.msra.mxu0 0.0
        %799 = vmatprep.subr.mxu0 0.0
        %800 = vmatpush1.msra.mxu0 0.0
        %801 = vmatprep.subr.mxu0 0.0
        %802 = vmatpush1.msra.mxu0 0.0
        %803 = vmatprep.subr.mxu0 0.0
        %804 = vmatpush1.msra.mxu0 0.0
        %805 = vmatprep.mubr.f32.mxu0 0.0
        %806 = vmatmul.mubr.f32.gmra.mrb[0].mxu0 %v568
        %v807 = vpop.f32.mrb[0].mxu0
        %v808 = vadd.f32 %v704, %v807
        %v809 = vpop.f32.mrb[0].mxu0
        %v810 = vadd.f32 %v708, %v809
        %811 = vdwg.mxu0
        %812 = vmatprep.subr.mxu0 %v574
        %813 = vmatpush1.msra.mxu0 %v573
        %814 = vmatprep.subr.mxu0 %v582
        %815 = vmatpush1.msra.mxu0 %v581
        %816 = vmatprep.subr.mxu0 %v590
        %817 = vmatpush1.msra.mxu0 %v589
        %818 = vmatprep.subr.mxu0 %v598
        %819 = vmatpush1.msra.mxu0 %v597
        %820 = vmatprep.subr.mxu0 %v606
        %821 = vmatpush1.msra.mxu0 %v605
        %822 = vmatprep.subr.mxu0 %v614
        %823 = vmatpush1.msra.mxu0 %v613
        %824 = vmatprep.subr.mxu0 %v622
        %825 = vmatpush1.msra.mxu0 %v621
        %826 = vmatprep.subr.mxu0 %v630
        %827 = vmatpush1.msra.mxu0 %v629
        %828 = vmatprep.subr.mxu0 %v638
        %829 = vmatpush1.msra.mxu0 %v637
        %830 = vmatprep.subr.mxu0 %v646
        %831 = vmatpush1.msra.mxu0 %v645
        %832 = vmatprep.subr.mxu0 %v654
        %833 = vmatpush1.msra.mxu0 %v653
        %834 = vmatprep.subr.mxu0 %v662
        %835 = vmatpush1.msra.mxu0 %v661
        %836 = vmatprep.subr.mxu0 %v670
        %837 = vmatpush1.msra.mxu0 %v669
        %838 = vmatprep.subr.mxu0 %v678
        %839 = vmatpush1.msra.mxu0 %v677
        %840 = vmatprep.subr.mxu0 %v686
        %841 = vmatpush1.msra.mxu0 %v685
        %842 = vmatprep.subr.mxu0 %v694
        %843 = vmatpush1.msra.mxu0 %v693
        %844 = vmatprep.subr.mxu0 0.0
        %845 = vmatpush1.msra.mxu0 0.0
        %846 = vmatprep.subr.mxu0 0.0
        %847 = vmatpush1.msra.mxu0 0.0
        %848 = vmatprep.subr.mxu0 0.0
        %849 = vmatpush1.msra.mxu0 0.0
        %850 = vmatprep.subr.mxu0 0.0
        %851 = vmatpush1.msra.mxu0 0.0
        %852 = vmatprep.subr.mxu0 0.0
        %853 = vmatpush1.msra.mxu0 0.0
        %854 = vmatprep.subr.mxu0 0.0
        %855 = vmatpush1.msra.mxu0 0.0
        %856 = vmatprep.subr.mxu0 0.0
        %857 = vmatpush1.msra.mxu0 0.0
        %858 = vmatprep.subr.mxu0 0.0
        %859 = vmatpush1.msra.mxu0 0.0
        %860 = vmatprep.subr.mxu0 0.0
        %861 = vmatpush1.msra.mxu0 0.0
        %862 = vmatprep.subr.mxu0 0.0
        %863 = vmatpush1.msra.mxu0 0.0
        %864 = vmatprep.subr.mxu0 0.0
        %865 = vmatpush1.msra.mxu0 0.0
        %866 = vmatprep.subr.mxu0 0.0
        %867 = vmatpush1.msra.mxu0 0.0
        %868 = vmatprep.subr.mxu0 0.0
        %869 = vmatpush1.msra.mxu0 0.0
        %870 = vmatprep.subr.mxu0 0.0
        %871 = vmatpush1.msra.mxu0 0.0
        %872 = vmatprep.subr.mxu0 0.0
        %873 = vmatpush1.msra.mxu0 0.0
        %874 = vmatprep.subr.mxu0 0.0
        %875 = vmatpush1.msra.mxu0 0.0
        %876 = vmatprep.mubr.f32.mxu0 0.0
        %877 = vmatmul.mubr.f32.gmra.mrb[0].mxu0 %v568
        %v878 = vpop.f32.mrb[0].mxu0
        %v879 = vadd.f32 %v712, %v878
        %v880 = vpop.f32.mrb[0].mxu0
        %v881 = vadd.f32 %v716, %v880
        %882 = vdwg.mxu0
        %883 = vmatprep.subr.mxu0 %v576
        %884 = vmatpush1.msra.mxu0 %v575
        %885 = vmatprep.subr.mxu0 %v584
        %886 = vmatpush1.msra.mxu0 %v583
        %887 = vmatprep.subr.mxu0 %v592
        %888 = vmatpush1.msra.mxu0 %v591
        %889 = vmatprep.subr.mxu0 %v600
        %890 = vmatpush1.msra.mxu0 %v599
        %891 = vmatprep.subr.mxu0 %v608
        %892 = vmatpush1.msra.mxu0 %v607
        %893 = vmatprep.subr.mxu0 %v616
        %894 = vmatpush1.msra.mxu0 %v615
        %895 = vmatprep.subr.mxu0 %v624
        %896 = vmatpush1.msra.mxu0 %v623
        %897 = vmatprep.subr.mxu0 %v632
        %898 = vmatpush1.msra.mxu0 %v631
        %899 = vmatprep.subr.mxu0 %v640
        %900 = vmatpush1.msra.mxu0 %v639
        %901 = vmatprep.subr.mxu0 %v648
        %902 = vmatpush1.msra.mxu0 %v647
        %903 = vmatprep.subr.mxu0 %v656
        %904 = vmatpush1.msra.mxu0 %v655
        %905 = vmatprep.subr.mxu0 %v664
        %906 = vmatpush1.msra.mxu0 %v663
        %907 = vmatprep.subr.mxu0 %v672
        %908 = vmatpush1.msra.mxu0 %v671
        %909 = vmatprep.subr.mxu0 %v680
        %910 = vmatpush1.msra.mxu0 %v679
        %911 = vmatprep.subr.mxu0 %v688
        %912 = vmatpush1.msra.mxu0 %v687
        %913 = vmatprep.subr.mxu0 %v696
        %914 = vmatpush1.msra.mxu0 %v695
        %915 = vmatprep.subr.mxu0 0.0
        %916 = vmatpush1.msra.mxu0 0.0
        %917 = vmatprep.subr.mxu0 0.0
        %918 = vmatpush1.msra.mxu0 0.0
        %919 = vmatprep.subr.mxu0 0.0
        %920 = vmatpush1.msra.mxu0 0.0
        %921 = vmatprep.subr.mxu0 0.0
        %922 = vmatpush1.msra.mxu0 0.0
        %923 = vmatprep.subr.mxu0 0.0
        %924 = vmatpush1.msra.mxu0 0.0
        %925 = vmatprep.subr.mxu0 0.0
        %926 = vmatpush1.msra.mxu0 0.0
        %927 = vmatprep.subr.mxu0 0.0
        %928 = vmatpush1.msra.mxu0 0.0
        %929 = vmatprep.subr.mxu0 0.0
        %930 = vmatpush1.msra.mxu0 0.0
        %931 = vmatprep.subr.mxu0 0.0
        %932 = vmatpush1.msra.mxu0 0.0
        %933 = vmatprep.subr.mxu0 0.0
        %934 = vmatpush1.msra.mxu0 0.0
        %935 = vmatprep.subr.mxu0 0.0
        %936 = vmatpush1.msra.mxu0 0.0
        %937 = vmatprep.subr.mxu0 0.0
        %938 = vmatpush1.msra.mxu0 0.0
        %939 = vmatprep.subr.mxu0 0.0
        %940 = vmatpush1.msra.mxu0 0.0
        %941 = vmatprep.subr.mxu0 0.0
        %942 = vmatpush1.msra.mxu0 0.0
        %943 = vmatprep.subr.mxu0 0.0
        %944 = vmatpush1.msra.mxu0 0.0
        %945 = vmatprep.subr.mxu0 0.0
        %946 = vmatpush1.msra.mxu0 0.0
        %947 = vmatprep.mubr.f32.mxu0 0.0
        %948 = vmatmul.mubr.f32.gmra.mrb[0].mxu0 %v568
        %v949 = vpop.f32.mrb[0].mxu0
        %v950 = vadd.f32 %v720, %v949
        %v951 = vpop.f32.mrb[0].mxu0
        %v952 = vadd.f32 %v724, %v951
        %953 = vdwg.mxu0
        %954 = vmatprep.subr.mxu0 %v578
        %955 = vmatpush1.msra.mxu0 %v577
        %956 = vmatprep.subr.mxu0 %v586
        %957 = vmatpush1.msra.mxu0 %v585
        %958 = vmatprep.subr.mxu0 %v594
        %959 = vmatpush1.msra.mxu0 %v593
        %960 = vmatprep.subr.mxu0 %v602
        %961 = vmatpush1.msra.mxu0 %v601
        %962 = vmatprep.subr.mxu0 %v610
        %963 = vmatpush1.msra.mxu0 %v609
        %964 = vmatprep.subr.mxu0 %v618
        %965 = vmatpush1.msra.mxu0 %v617
        %966 = vmatprep.subr.mxu0 %v626
        %967 = vmatpush1.msra.mxu0 %v625
        %968 = vmatprep.subr.mxu0 %v634
        %969 = vmatpush1.msra.mxu0 %v633
        %970 = vmatprep.subr.mxu0 %v642
        %971 = vmatpush1.msra.mxu0 %v641
        %972 = vmatprep.subr.mxu0 %v650
        %973 = vmatpush1.msra.mxu0 %v649
        %974 = vmatprep.subr.mxu0 %v658
        %975 = vmatpush1.msra.mxu0 %v657
        %976 = vmatprep.subr.mxu0 %v666
        %977 = vmatpush1.msra.mxu0 %v665
        %978 = vmatprep.subr.mxu0 %v674
        %979 = vmatpush1.msra.mxu0 %v673
        %980 = vmatprep.subr.mxu0 %v682
        %981 = vmatpush1.msra.mxu0 %v681
        %982 = vmatprep.subr.mxu0 %v690
        %983 = vmatpush1.msra.mxu0 %v689
        %984 = vmatprep.subr.mxu0 %v698
        %985 = vmatpush1.msra.mxu0 %v697
        %986 = vmatprep.subr.mxu0 0.0
        %987 = vmatpush1.msra.mxu0 0.0
        %988 = vmatprep.subr.mxu0 0.0
        %989 = vmatpush1.msra.mxu0 0.0
        %990 = vmatprep.subr.mxu0 0.0
        %991 = vmatpush1.msra.mxu0 0.0
        %992 = vmatprep.subr.mxu0 0.0
        %993 = vmatpush1.msra.mxu0 0.0
        %994 = vmatprep.subr.mxu0 0.0
        %995 = vmatpush1.msra.mxu0 0.0
        %996 = vmatprep.subr.mxu0 0.0
        %997 = vmatpush1.msra.mxu0 0.0
        %998 = vmatprep.subr.mxu0 0.0
        %999 = vmatpush1.msra.mxu0 0.0
        %1000 = vmatprep.subr.mxu0 0.0
        %1001 = vmatpush1.msra.mxu0 0.0
        %1002 = vmatprep.subr.mxu0 0.0
        %1003 = vmatpush1.msra.mxu0 0.0
        %1004 = vmatprep.subr.mxu0 0.0
        %1005 = vmatpush1.msra.mxu0 0.0
        %1006 = vmatprep.subr.mxu0 0.0
        %1007 = vmatpush1.msra.mxu0 0.0
        %1008 = vmatprep.subr.mxu0 0.0
        %1009 = vmatpush1.msra.mxu0 0.0
        %1010 = vmatprep.subr.mxu0 0.0
        %1011 = vmatpush1.msra.mxu0 0.0
        %1012 = vmatprep.subr.mxu0 0.0
        %1013 = vmatpush1.msra.mxu0 0.0
        %1014 = vmatprep.subr.mxu0 0.0
        %1015 = vmatpush1.msra.mxu0 0.0
        %1016 = vmatprep.subr.mxu0 0.0
        %1017 = vmatpush1.msra.mxu0 0.0
        %1018 = vmatprep.mubr.f32.mxu0 0.0
        %1019 = vmatmul.mubr.f32.gmra.mrb[0].mxu0 %v568
        %v1020 = vpop.f32.mrb[0].mxu0
        %v1021 = vadd.f32 %v728, %v1020
        %v1022 = vpop.f32.mrb[0].mxu0
        %v1023 = vadd.f32 %v732, %v1022
        %1024 = vdwg.mxu0
        %1025 = vst [vmem:[%s298] sm:$0xff] %v808
        %1026 = vst [vmem:[%s298 + $0x8] sm:$0xff] %v810
        %1027 = vst [vmem:[%s298 + $0x10] sm:$0xff] %v879
        %1028 = vst [vmem:[%s298 + $0x18] sm:$0xff] %v881
        %1029 = vst [vmem:[%s298 + $0x20] sm:$0xff] %v950
        %1030 = vst [vmem:[%s298 + $0x28] sm:$0xff] %v952
        %1031 = vst [vmem:[%s298 + $0x30] sm:$0xff] %v1021
        %1032 = vst [vmem:[%s298 + $0x38] sm:$0xff] %v1023
        %s1033 = sand.u32 %s163, 1
        %s1034 = scalar_lea.sflag [#allocation4], %s1033
        %s1035 = sand.u32 %s163, 1
        %s1036 = smul.addr %s1035, 64
        %s1037 = scalar_lea.vmem [#allocation8], %s1036
        // Predicated region
        $region57: #{tpu_custom_call.1} parent=43 // pred_check
          %p1038 = pneg %p173
        $region58: #{tpu_custom_call.1} parent=43 // pred_check_branch
          %1040 = sbr.rel (%p1038) target = $region60
        $region59: #{tpu_custom_call.1} parent=43 // pred_region
          %s1042 = ssub.s32 1024, 1024
          %1043 = vsyncadd %s1034, %s1042
          %s1044 = smul.addr %s24, 8
          %s1045 = smul.addr %s1044, 128
          %s1046 = scalar_lea.hbm %s6, %s1045
          %s1048 = sshll.u32 %s1037, 4
          %s1049 = int_to_ptr.vmem [resolvable:$true] %s1048
          %1051 = dma.vmem_to_hbm [thread:$0]  %s1049, 1024, %s1046, %s1034
        $region60: #{tpu_custom_call.1} parent=43 // pred_fallthru
          _
      $region44: #{tpu_custom_call.1} parent=5 // pred_fallthru
        _
      %p1052 = scmp.le.s32.totalorder 2, %s19
      // Predicated region
      $region61: #{tpu_custom_call.1} parent=5 // pred_check
        %p1053 = pneg %p1052
      $region62: #{tpu_custom_call.1} parent=5 // pred_check_branch
        %1055 = sbr.rel (%p1053) target = $region64
      $region63: #{tpu_custom_call.1} parent=5 // pred_region
        %s1056 = ssub.s32 %s19, 2
        // Predicated region
        $region65: #{tpu_custom_call.1} parent=63 // pred_check
          %p1057 = pneg %p179
        $region66: #{tpu_custom_call.1} parent=63 // pred_check_branch
          %1059 = sbr.rel (%p1057) target = $region68
        $region67: #{tpu_custom_call.1} parent=63 // pred_region
          %s1060 = sand.u32 %s164, 1
          %s1061 = scalar_lea.sflag [#allocation4], %s1060
          %s1062 = sand.u32 %s164, 1
          %s1063 = smul.addr %s1062, 64
          %s1064 = scalar_lea.vmem [#allocation8], %s1063
          %1065 = dma.done %s1061, 1024
        $region68: #{tpu_custom_call.1} parent=63 // pred_fallthru
          _
      $region64: #{tpu_custom_call.1} parent=5 // pred_fallthru
        _
    $region6: #{tpu_custom_call.1} parent=1 // loop_footer
      %s23 = sadd.s32 1, %s19
    $region7: #{tpu_custom_call.1} parent=1 // loop_footer_branch
      %18 = sbr.rel target = $region3
    $region8: #{tpu_custom_call.1} parent=1 // loop_exit
      _
    %1066 = vsyncpa [#allocation3], 1
    %s1067 = scalar_lea.sflag [#allocation3], 1
    %1068 = vsyncpa %s1067, 1
    %1069 = vsyncpa [#allocation6], 1
    %1070 = vsyncpa [#allocation4], 1
    %s1071 = scalar_lea.sflag [#allocation4], 1
    %1072 = vsyncpa %s1071, 1

</llo_original>
